<compile_context>
chip_gen: v5e
topology: v5e:2x2
jax: 0.10.0
libtpu: 0.0.40
codegen_flags: <defaults>
</compile_context>

<pallas_src>
import functools

import jax
import jax.numpy as jnp
from jax.experimental import pallas as pl
from jax.experimental.pallas import tpu as pltpu


def _round_up(x, m):
    return ((x + m - 1) // m) * m


def _vmem_limit_bytes():
    """Scoped-VMEM limit gated on the chip (v7x has only 64 MiB per TC)."""
    try:
        cap = getattr(pltpu.get_tpu_info(), "vmem_capacity_bytes", None)
    except Exception:  # query unavailable -> conservative default
        cap = None
    if cap is not None and cap <= 64 * 1024 * 1024:
        return 40 * 1024 * 1024  # v7x-class: leave headroom under 64 MiB
    return 64 * 1024 * 1024      # v5e/v6e: 128 MiB physical


def _maybe_buffered_spec(block_shape, index_map, buffers):
    """BlockSpec with a deeper pipeline for the dominant stream, if supported."""
    try:
        return pl.BlockSpec(block_shape, index_map, pipeline_mode=pl.Buffered(buffers))
    except (TypeError, AttributeError):  # older jax: default 2-deep pipeline
        return pl.BlockSpec(block_shape, index_map)


def _member_mean_kernel(w_ref, o_ref, acc_ref, *, inv_n):
    """Grid = (K tiles, D_out tiles, members): W_mean tile = sum_n W_n tile / N."""
    n = pl.program_id(2)

    @pl.when(n == 0)
    def _():
        acc_ref[...] = jnp.zeros_like(acc_ref)

    acc_ref[...] += w_ref[...].astype(jnp.float32)

    @pl.when(n == pl.num_programs(2) - 1)
    def _():
        o_ref[...] = (acc_ref[...] * inv_n).astype(o_ref.dtype)


def _matmul_bias_kernel(x_ref, w_ref, b_ref, o_ref, acc_ref):
    """Grid = (B tiles, D_out tiles, K tiles): standard tiled matmul + bias."""
    k = pl.program_id(2)

    @pl.when(k == 0)
    def _():
        acc_ref[...] = jnp.zeros_like(acc_ref)

    acc_ref[...] += jnp.dot(
        x_ref[...], w_ref[...], preferred_element_type=jnp.float32
    )

    @pl.when(k == pl.num_programs(2) - 1)
    def _():
        o_ref[...] = (acc_ref[...] + b_ref[...].astype(jnp.float32)).astype(o_ref.dtype)


def ensemble_linear_forward(
    x, w_stack, b_stack, *, tm=512, tn=512, tk=1024, compute_dtype=jnp.bfloat16
):
    """mean_i(x @ w_stack[i] + b_stack[i]).

    x: (B, D_in); w_stack: (N, D_in, D_out); b_stack: (N, D_out).
    Returns (B, D_out) in x.dtype.  The matmul runs in `compute_dtype`
    (bf16 by default, per perf feedback) with f32 MXU accumulation.
    """
    B, D_in = x.shape
    N, D_in_w, D_out = w_stack.shape
    assert D_in_w == D_in and b_stack.shape == (N, D_out)

    vmem_limit = _vmem_limit_bytes()

    # Tile sizes: lane dims multiples of 128, sublane multiples of 8.
    tm = min(tm, _round_up(B, 8))
    tn = min(tn, _round_up(D_out, 128))
    tk = min(tk, _round_up(D_in, 128))

    # v7x: if the batch axis is a single tile, split D_out so the "parallel"
    # j axis has >=2 blocks and both TensorCores get work.
    if _round_up(B, tm) // tm == 1:
        while tn > 128 and _round_up(D_out, tn) // tn < 2:
            tn //= 2

    Bp = _round_up(B, tm)
    Kp = _round_up(D_in, tk)
    Op = _round_up(D_out, tn)

    # Pad + cast once in the wrapper (no-ops for aligned shapes / matching dtype).
    x_p = x.astype(compute_dtype)
    if (Bp, Kp) != (B, D_in):
        x_p = jnp.pad(x_p, ((0, Bp - B), (0, Kp - D_in)))
    w_p = w_stack
    if (Kp, Op) != (D_in, D_out):
        w_p = jnp.pad(w_stack, ((0, 0), (0, Kp - D_in), (0, Op - D_out)))
    b_mean = jnp.mean(b_stack.astype(jnp.float32), axis=0, keepdims=True)  # tiny, hoisted
    if Op != D_out:
        b_mean = jnp.pad(b_mean, ((0, 0), (0, Op - D_out)))

    w_bytes = jnp.dtype(w_stack.dtype).itemsize
    c_bytes = jnp.dtype(compute_dtype).itemsize
    o_bytes = jnp.dtype(x.dtype).itemsize

    # ---- Kernel 1: one-pass member mean  W_mean = (sum_n W_n) / N ----------
    mean_cost = pl.CostEstimate(
        flops=int(N * Kp * Op),
        transcendentals=0,
        bytes_accessed=int(N * Kp * Op * w_bytes + Kp * Op * c_bytes),
    )
    w_mean = pl.pallas_call(
        functools.partial(_member_mean_kernel, inv_n=1.0 / float(N)),
        out_shape=jax.ShapeDtypeStruct((Kp, Op), compute_dtype),
        grid_spec=pltpu.PrefetchScalarGridSpec(
            num_scalar_prefetch=0,
            grid=(Kp // tk, Op // tn, N),
            in_specs=[pl.BlockSpec((None, tk, tn), lambda k, j, n: (n, k, j))],
            out_specs=pl.BlockSpec((tk, tn), lambda k, j, n: (k, j)),
            scratch_shapes=[pltpu.VMEM((tk, tn), jnp.float32)],
        ),
        compiler_params=pltpu.CompilerParams(
            dimension_semantics=("parallel", "parallel", "arbitrary"),
            vmem_limit_bytes=vmem_limit,
        ),
        cost_estimate=mean_cost,
    )(w_p)

    # ---- Kernel 2: tiled matmul with bias epilogue --------------------------
    mm_cost = pl.CostEstimate(
        flops=int(2 * Bp * Kp * Op),
        transcendentals=0,
        bytes_accessed=int(
            (Op // tn) * Bp * Kp * c_bytes      # X re-streamed per j tile
            + (Bp // tm) * Kp * Op * c_bytes    # W_mean re-streamed per i tile
            + Bp * Op * o_bytes
        ),
    )
    out_p = pl.pallas_call(
        _matmul_bias_kernel,
        out_shape=jax.ShapeDtypeStruct((Bp, Op), x.dtype),
        grid_spec=pltpu.PrefetchScalarGridSpec(
            num_scalar_prefetch=0,
            grid=(Bp // tm, Op // tn, Kp // tk),
            in_specs=[
                pl.BlockSpec((tm, tk), lambda i, j, k: (i, k)),
                # W_mean is the dominant stream; request a 3-deep pipeline.
                _maybe_buffered_spec((tk, tn), lambda i, j, k: (k, j), buffers=3),
                pl.BlockSpec((1, tn), lambda i, j, k: (0, j)),
            ],
            out_specs=pl.BlockSpec((tm, tn), lambda i, j, k: (i, j)),
            scratch_shapes=[pltpu.VMEM((tm, tn), jnp.float32)],
        ),
        compiler_params=pltpu.CompilerParams(
            dimension_semantics=("parallel", "parallel", "arbitrary"),
            vmem_limit_bytes=vmem_limit,
        ),
        cost_estimate=mm_cost,
    )(x_p, w_mean, b_mean)

    return out_p[:B, :D_out]


def _ensemble_reference(x, w_stack, b_stack):
    xf = x.astype(jnp.float32)
    wf = w_stack.astype(jnp.float32)
    bf = b_stack.astype(jnp.float32)
    pred = jnp.einsum("bi,nio->nbo", xf, wf, precision=jax.lax.Precision.HIGHEST)
    return jnp.mean(pred + bf[:, None, :], axis=0)


if __name__ == "__main__":
    key = jax.random.PRNGKey(0)
    k1, k2 = jax.random.split(key)

    def run_case(subkey, *, B, D_in, D_out, N, w_dtype, atol, rtol, **fwd_kwargs):
        kx, kw, kb = jax.random.split(subkey, 3)
        x = jax.random.normal(kx, (B, D_in), dtype=jnp.float32)
        w = (0.1 * jax.random.normal(kw, (N, D_in, D_out), dtype=jnp.float32)).astype(
            w_dtype
        )
        b = 0.1 * jax.random.normal(kb, (N, D_out), dtype=jnp.float32)

        out = jax.block_until_ready(ensemble_linear_forward(x, w, b, **fwd_kwargs))
        ref = _ensemble_reference(x, w, b)
        assert out.shape == (B, D_out)
        assert jnp.allclose(out.astype(jnp.float32), ref, atol=atol, rtol=rtol), (
            f"mismatch vs reference (B={B}, D_in={D_in}, D_out={D_out}, N={N})"
        )

    # Case 1: single-tile shapes, f32 weights, f32 compute path, default tiles
    # (clamped down to the problem size).
    run_case(
        k1, B=8, D_in=32, D_out=16, N=4, w_dtype=jnp.float32,
        compute_dtype=jnp.float32, atol=1e-4, rtol=1e-4,
    )

    # Case 2: multi-tile grids (matmul grid (3,2,2), member-mean grid (2,2,5))
    # with padding, bf16 weights, and the default bf16 compute path.
    run_case(
        k2, B=20, D_in=192, D_out=200, N=5, w_dtype=jnp.bfloat16,
        tm=8, tn=128, tk=128, atol=3e-2, rtol=3e-2,
    )

    print("KERNEL_OK")
</pallas_src>

<mosaic_0001>
module attributes {stable_mosaic.version = 11 : i64} {
  func.func @_member_mean_kernel(%arg0: i32, %arg1: i32, %arg2: i32, %arg3: memref<1x128x128xf32, #tpu.memory_space<vmem>>, %arg4: memref<128x128xf32, #tpu.memory_space<vmem>>, %arg5: memref<128x128xf32, #tpu.memory_space<vmem>>) attributes {dimension_semantics = [#tpu.dimension_semantics<parallel>, #tpu.dimension_semantics<parallel>, #tpu.dimension_semantics<arbitrary>], iteration_bounds = array<i64: 1, 1, 4>, scalar_prefetch = 0 : i64, scratch_operands = 1 : i64, tpu.core_type = #tpu.core_type<tc>, window_params = [{transform_indices = @transform_0, window_bounds = array<i64: 1, 128, 128>}, {transform_indices = @transform_1, window_bounds = array<i64: 128, 128>}]} {
    %c0_i32 = arith.constant 0 : i32
    %0 = arith.cmpi eq, %arg2, %c0_i32 : i32
    %1 = arith.extui %0 : i1 to i32
    %c0_i32_0 = arith.constant 0 : i32
    %2 = arith.cmpi ne, %1, %c0_i32_0 : i32
    scf.if %2 {
      %cst = arith.constant 0.000000e+00 : f32
      %11 = vector.broadcast %cst : f32 to vector<128x128xf32>
      %c0_8 = arith.constant 0 : index
      %c0_9 = arith.constant 0 : index
      %12 = vector.load %arg5[%c0_8, %c0_9] : memref<128x128xf32, #tpu.memory_space<vmem>>, vector<128x128xf32>
      tpu.vector_store %arg5[%c0_8, %c0_9], %11 {strides = array<i32>} : memref<128x128xf32, #tpu.memory_space<vmem>>, vector<128x128xf32>,
    } else {
    }
    %c0 = arith.constant 0 : index
    %c0_1 = arith.constant 0 : index
    %3 = vector.load %arg5[%c0, %c0_1] : memref<128x128xf32, #tpu.memory_space<vmem>>, vector<128x128xf32>
    %c0_2 = arith.constant 0 : index
    %c0_3 = arith.constant 0 : index
    %c0_4 = arith.constant 0 : index
    %4 = vector.load %arg3[%c0_2, %c0_3, %c0_4] : memref<1x128x128xf32, #tpu.memory_space<vmem>>, vector<1x128x128xf32>
    %5 = vector.shape_cast %4 : vector<1x128x128xf32> to vector<128x128xf32>
    %6 = arith.addf %3, %5 : vector<128x128xf32>
    %c0_5 = arith.constant 0 : index
    %c0_6 = arith.constant 0 : index
    %7 = vector.load %arg5[%c0_5, %c0_6] : memref<128x128xf32, #tpu.memory_space<vmem>>, vector<128x128xf32>
    tpu.vector_store %arg5[%c0_5, %c0_6], %6 {strides = array<i32>} : memref<128x128xf32, #tpu.memory_space<vmem>>, vector<128x128xf32>,
    %c3_i32 = arith.constant 3 : i32
    %8 = arith.cmpi eq, %arg2, %c3_i32 : i32
    %9 = arith.extui %8 : i1 to i32
    %c0_i32_7 = arith.constant 0 : i32
    %10 = arith.cmpi ne, %9, %c0_i32_7 : i32
    scf.if %10 {
      %c0_8 = arith.constant 0 : index
      %c0_9 = arith.constant 0 : index
      %11 = vector.load %arg5[%c0_8, %c0_9] : memref<128x128xf32, #tpu.memory_space<vmem>>, vector<128x128xf32>
      %cst = arith.constant 2.500000e-01 : f32
      %12 = vector.broadcast %cst : f32 to vector<128x128xf32>
      %13 = arith.mulf %11, %12 : vector<128x128xf32>
      %c0_10 = arith.constant 0 : index
      %c0_11 = arith.constant 0 : index
      %14 = vector.load %arg4[%c0_10, %c0_11] : memref<128x128xf32, #tpu.memory_space<vmem>>, vector<128x128xf32>
      tpu.vector_store %arg4[%c0_10, %c0_11], %13 {strides = array<i32>} : memref<128x128xf32, #tpu.memory_space<vmem>>, vector<128x128xf32>,
    } else {
    }
    return
  }
  func.func @transform_0(%arg0: i32, %arg1: i32, %arg2: i32) -> (i32, i32, i32) {
    %c0_i32 = arith.constant 0 : i32
    return %arg2, %arg0, %arg1 : i32, i32, i32
  }
  func.func @transform_1(%arg0: i32, %arg1: i32, %arg2: i32) -> (i32, i32) {
    %c0_i32 = arith.constant 0 : i32
    return %arg0, %arg1 : i32, i32
  }
}

</mosaic_0001>

<llo_original>
// kernel: tpu_custom_call.1
$region0: #{tpu_custom_call.1}
  #allocation0 [shape = 'u32[]', space=smem, size = 0x4, offset = 0x4, fixed_abs, tag = 'smem constant byte address 0x4 - core index']
  #allocation1 [shape = 'u32[72,128]{1,0:T(1,128)}', space=vmem, size = 0x9000, scoped, tag = 'internal scratch']
  #allocation2 [shape = 'f32[128,128]{1,0:T(8,128)}', space=vmem, size = 0x10000, scoped, tag = 'scratch operand']
  %s0 = inlined_call_operand.hbm [shape: f32[4,128,128], index: 0, kind: input, shape index: {}]
  %s1 = inlined_call_operand.hbm [shape: f32[128,128], index: 1, kind: output, shape index: {}]
  %s2 = sld [smem:[#allocation0]]
  $region49: #{tpu_custom_call.1} parent=0
    _
  %s4 = ssub.s32 1, %s2
  %s5 = scalar_select 0, %s4, %s2
  $region1: #{tpu_custom_call.1} parent=0
    #allocation3 [shape = 'u8[131072]{0}', space=vmem, size = 0x20000, scoped, tag = 'input window, operand 0']
    #allocation4 [shape = 's32[2]{0}', space=sflag, size = 0x8, scoped, tag = 'scoped memory for tpu_custom_call.1']
    #allocation5 [shape = 's32[2]{0}', space=sflag, size = 0x8, scoped, tag = 'scoped memory for tpu_custom_call.1']
    #allocation6 [shape = 'u8[65536]{0}', space=vmem, size = 0x10000, scoped, tag = 'output window, operand 0, single buffered']
    %6 = vsyncpa [#allocation4], 0
    %s7 = scalar_lea.sflag [#allocation4], 1
    %8 = vsyncpa %s7, 0
    %9 = vsyncpa [#allocation5], 0
    loop: start=0, step=1, limit=6
    $region2: #{tpu_custom_call.1} parent=1 // loop_pre_header
      _
    $region3: #{tpu_custom_call.1} parent=1 // loop_header
      %s11 = sphi 0, %s15
      %p12 = scmp.ge.s32.totalorder %s11, 6
      %s18 = sphi 0, %s37
      %s19 = sphi 0, %s33
      %s20 = sphi 0, %s29
      %s21 = sphi 0, %s18
      %s22 = sphi 0, %s19
      %s23 = sphi 0, %s20
      %s24 = sphi 0, %s21
      %s25 = sphi 0, %s22
      %s26 = sphi 0, %s23
      %s44 = sphi 0, %s46
      %s47 = sphi 0, %s44
      %s48 = sphi 0, %s47
      %s64 = sphi 0, %s48
      %s72 = sphi 0, %s74
      %s75 = sphi 0, %s72
      %s76 = sphi 0, %s75
      %s92 = sphi 0, %s76
    $region4: #{tpu_custom_call.1} parent=1 // loop_header_branch
      %14 = sbr.rel (%p12) target = $region8
    $region5: #{tpu_custom_call.1} parent=1 // loop_body
      %s16 = ssub.s32 %s11, 1
      %s17 = ssub.s32 %s11, 2
      %s27 = sadd.s32 1, %s20
      %p28 = scmp.ge.s32.totalorder %s27, 4
      %s29 = scalar_select %p28, 0, %s27
      %s30 = sadd.s32 1, %s19
      %s31 = scalar_select %p28, %s30, %s19
      %p32 = scmp.ge.s32.totalorder %s31, 1
      %s33 = scalar_select %p32, 0, %s31
      %s34 = sadd.s32 1, %s18
      %s35 = scalar_select %p32, %s34, %s18
      %p36 = scmp.ge.s32.totalorder %s35, 1
      %s37 = scalar_select %p36, 0, %s35
      %s38 = ssub.s32 %s20, %s29
      %s39 = ssub.s32 %s18, %s37
      %s40 = sor.u32 %s38, %s39
      %s41 = ssub.s32 %s19, %s33
      %s42 = sor.u32 %s40, %s41
      %p43 = scmp.eq.s32.totalorder %s42, 0
      %s45 = sadd.s32 %s44, 1
      %s46 = scalar_select %p43, %s44, %s45
      %p49 = pneg %p43
      %p50 = scmp.eq.s32.totalorder %s11, 3
      %p51 = por %p49, %p50
      %p52 = scmp.ne.s32.totalorder %s44, %s47
      %p53 = scmp.eq.s32.totalorder %s11, 0
      %p54 = por %p52, %p53
      %p55 = scmp.ne.s32.totalorder %s44, %s47
      %p56 = scmp.eq.s32.totalorder %s16, 3
      %p57 = por %p55, %p56
      %p58 = scmp.ne.s32.totalorder %s47, %s48
      %p59 = scmp.eq.s32.totalorder %s16, 0
      %p60 = por %p58, %p59
      %p61 = scmp.ne.s32.totalorder %s47, %s48
      %p62 = scmp.eq.s32.totalorder %s17, 3
      %p63 = por %p61, %p62
      %p65 = scmp.ne.s32.totalorder %s48, %s64
      %p66 = scmp.eq.s32.totalorder %s17, 0
      %p67 = por %p65, %p66
      %s68 = ssub.s32 %s18, %s37
      %s69 = ssub.s32 %s19, %s33
      %s70 = sor.u32 %s68, %s69
      %p71 = scmp.eq.s32.totalorder %s70, 0
      %s73 = sadd.s32 %s72, 1
      %s74 = scalar_select %p71, %s72, %s73
      %p77 = pneg %p71
      %p78 = scmp.eq.s32.totalorder %s11, 3
      %p79 = por %p77, %p78
      %p80 = scmp.ne.s32.totalorder %s72, %s75
      %p81 = scmp.eq.s32.totalorder %s11, 0
      %p82 = por %p80, %p81
      %p83 = scmp.ne.s32.totalorder %s72, %s75
      %p84 = scmp.eq.s32.totalorder %s16, 3
      %p85 = por %p83, %p84
      %p86 = scmp.ne.s32.totalorder %s75, %s76
      %p87 = scmp.eq.s32.totalorder %s16, 0
      %p88 = por %p86, %p87
      %p89 = scmp.ne.s32.totalorder %s75, %s76
      %p90 = scmp.eq.s32.totalorder %s17, 3
      %p91 = por %p89, %p90
      %p93 = scmp.ne.s32.totalorder %s76, %s92
      %p94 = scmp.eq.s32.totalorder %s17, 0
      %p95 = por %p93, %p94
      %p96 = scmp.le.s32.totalorder 1, %s11
      %p97 = scmp.lt.s32.totalorder %s11, 5
      %p98 = pnand %p96, %p97
      %p99 = pneg %p98
      // Predicated region
      $region9: #{tpu_custom_call.1} parent=5 // pred_check
        _
      $region10: #{tpu_custom_call.1} parent=5 // pred_check_branch
        %101 = sbr.rel (%p98) target = $region12
      $region11: #{tpu_custom_call.1} parent=5 // pred_region
        %s102 = ssub.s32 %s11, 1
      $region12: #{tpu_custom_call.1} parent=5 // pred_fallthru
        _
      %p103 = scmp.lt.s32.totalorder %s11, 4
      // Predicated region
      $region13: #{tpu_custom_call.1} parent=5 // pred_check
        %p104 = pneg %p103
      $region14: #{tpu_custom_call.1} parent=5 // pred_check_branch
        %106 = sbr.rel (%p104) target = $region16
      $region15: #{tpu_custom_call.1} parent=5 // pred_region
        // Predicated region
        $region17: #{tpu_custom_call.1} parent=15 // pred_check
          %p107 = pneg %p54
        $region18: #{tpu_custom_call.1} parent=15 // pred_check_branch
          %109 = sbr.rel (%p107) target = $region20
        $region19: #{tpu_custom_call.1} parent=15 // pred_region
          %s110 = sand.u32 %s44, 1
          %s111 = scalar_lea.sflag [#allocation4], %s110
          %s112 = sand.u32 %s44, 1
          %s113 = smul.addr %s112, 128
          %s114 = scalar_lea.vmem [#allocation3], %s113
          %s115 = smul.u32 16, %s18
          %117 = vsyncadd %s111, 0
          %s118 = sadd.s32 %s19, %s115
          %s119 = smul.addr %s20, 16
          %s120 = sadd.s32 %s118, %s119
          %s121 = smul.addr %s120, 8
          %s122 = scalar_lea.hbm %s0, %s121
          %s123 = sshll.u32 %s122, 4
          %s124 = int_to_ptr.hbm [resolvable:$true] %s123
          %s125 = sshll.u32 %s114, 4
          %s126 = int_to_ptr.vmem [resolvable:$true] %s125
          %131 = dma.hbm_to_vmem [thread:$0]  %s124, 2048, %s126, %s111, 128, 128, 8
        $region20: #{tpu_custom_call.1} parent=15 // pred_fallthru
          _
      $region16: #{tpu_custom_call.1} parent=5 // pred_fallthru
        _
      %p132 = scmp.le.s32.totalorder 1, %s11
      %p133 = scmp.lt.s32.totalorder %s11, 5
      %p134 = pnand %p132, %p133
      %p135 = pneg %p134
      // Predicated region
      $region21: #{tpu_custom_call.1} parent=5 // pred_check
        _
      $region22: #{tpu_custom_call.1} parent=5 // pred_check_branch
        %137 = sbr.rel (%p134) target = $region24
      $region23: #{tpu_custom_call.1} parent=5 // pred_region
        %s138 = ssub.s32 %s11, 1
        %s139 = sand.u32 %s47, 1
        %s140 = scalar_lea.sflag [#allocation4], %s139
        %s141 = sand.u32 %s47, 1
        %s142 = smul.addr %s141, 128
        %s143 = scalar_lea.vmem [#allocation3], %s142
        // Predicated region
        $region25: #{tpu_custom_call.1} parent=23 // pred_check
          %p144 = pneg %p60
        $region26: #{tpu_custom_call.1} parent=23 // pred_check_branch
          %146 = sbr.rel (%p144) target = $region28
        $region27: #{tpu_custom_call.1} parent=23 // pred_region
          %148 = dma.done %s140, 2048
        $region28: #{tpu_custom_call.1} parent=23 // pred_fallthru
          _
        %s149 = sand.u32 %s47, 1
        %s150 = scalar_lea.sflag [#allocation4], %s149
        %s151 = sand.u32 %s47, 1
        %s152 = smul.addr %s151, 128
        %s153 = scalar_lea.vmem [#allocation3], %s152
        %p154 = pneg %p60
        %p155 = pneg %p57
        %p156 = pneg %p88
        %p157 = pneg %p85
        %s158 = smul.u32 16, %s21
        %s159 = smul.u32 16, %s21
        %p160 = scmp.eq.s32.totalorder %s23, 0
        // Predicated region
        $region29: #{tpu_custom_call.1} parent=23 // pred_check
          %p161 = pneg %p160
        $region30: #{tpu_custom_call.1} parent=23 // pred_check_branch
          %163 = sbr.rel (%p161) target = $region32
        $region31: #{tpu_custom_call.1} parent=23 // pred_region
          %164 = vst [vmem:[#allocation2] sm:$0xff] 0.0
          %165 = vst [vmem:[#allocation2 + $0x8] sm:$0xff] 0.0
          %166 = vst [vmem:[#allocation2 + $0x10] sm:$0xff] 0.0
          %167 = vst [vmem:[#allocation2 + $0x18] sm:$0xff] 0.0
          %168 = vst [vmem:[#allocation2 + $0x20] sm:$0xff] 0.0
          %169 = vst [vmem:[#allocation2 + $0x28] sm:$0xff] 0.0
          %170 = vst [vmem:[#allocation2 + $0x30] sm:$0xff] 0.0
          %171 = vst [vmem:[#allocation2 + $0x38] sm:$0xff] 0.0
          %172 = vst [vmem:[#allocation2 + $0x40] sm:$0xff] 0.0
          %173 = vst [vmem:[#allocation2 + $0x48] sm:$0xff] 0.0
          %174 = vst [vmem:[#allocation2 + $0x50] sm:$0xff] 0.0
          %175 = vst [vmem:[#allocation2 + $0x58] sm:$0xff] 0.0
          %176 = vst [vmem:[#allocation2 + $0x60] sm:$0xff] 0.0
          %177 = vst [vmem:[#allocation2 + $0x68] sm:$0xff] 0.0
          %178 = vst [vmem:[#allocation2 + $0x70] sm:$0xff] 0.0
          %179 = vst [vmem:[#allocation2 + $0x78] sm:$0xff] 0.0
        $region32: #{tpu_custom_call.1} parent=23 // pred_fallthru
          _
        %v180 = vld [vmem:[#allocation2] sm:$0xff]
        %v181 = vld [vmem:[#allocation2 + $0x8] sm:$0xff]
        %v182 = vld [vmem:[#allocation2 + $0x10] sm:$0xff]
        %v183 = vld [vmem:[#allocation2 + $0x18] sm:$0xff]
        %v184 = vld [vmem:[#allocation2 + $0x20] sm:$0xff]
        %v185 = vld [vmem:[#allocation2 + $0x28] sm:$0xff]
        %v186 = vld [vmem:[#allocation2 + $0x30] sm:$0xff]
        %v187 = vld [vmem:[#allocation2 + $0x38] sm:$0xff]
        %v188 = vld [vmem:[#allocation2 + $0x40] sm:$0xff]
        %v189 = vld [vmem:[#allocation2 + $0x48] sm:$0xff]
        %v190 = vld [vmem:[#allocation2 + $0x50] sm:$0xff]
        %v191 = vld [vmem:[#allocation2 + $0x58] sm:$0xff]
        %v192 = vld [vmem:[#allocation2 + $0x60] sm:$0xff]
        %v193 = vld [vmem:[#allocation2 + $0x68] sm:$0xff]
        %v194 = vld [vmem:[#allocation2 + $0x70] sm:$0xff]
        %v195 = vld [vmem:[#allocation2 + $0x78] sm:$0xff]
        %v196 = vld [vmem:[%s143] sm:$0xff]
        %v197 = vld [vmem:[%s143 + $0x8] sm:$0xff]
        %v198 = vld [vmem:[%s143 + $0x10] sm:$0xff]
        %v199 = vld [vmem:[%s143 + $0x18] sm:$0xff]
        %v200 = vld [vmem:[%s143 + $0x20] sm:$0xff]
        %v201 = vld [vmem:[%s143 + $0x28] sm:$0xff]
        %v202 = vld [vmem:[%s143 + $0x30] sm:$0xff]
        %v203 = vld [vmem:[%s143 + $0x38] sm:$0xff]
        %v204 = vld [vmem:[%s143 + $0x40] sm:$0xff]
        %v205 = vld [vmem:[%s143 + $0x48] sm:$0xff]
        %v206 = vld [vmem:[%s143 + $0x50] sm:$0xff]
        %v207 = vld [vmem:[%s143 + $0x58] sm:$0xff]
        %v208 = vld [vmem:[%s143 + $0x60] sm:$0xff]
        %v209 = vld [vmem:[%s143 + $0x68] sm:$0xff]
        %v210 = vld [vmem:[%s143 + $0x70] sm:$0xff]
        %v211 = vld [vmem:[%s143 + $0x78] sm:$0xff]
        %v212 = vadd.f32 %v180, %v196
        %v213 = vadd.f32 %v181, %v197
        %v214 = vadd.f32 %v182, %v198
        %v215 = vadd.f32 %v183, %v199
        %v216 = vadd.f32 %v184, %v200
        %v217 = vadd.f32 %v185, %v201
        %v218 = vadd.f32 %v186, %v202
        %v219 = vadd.f32 %v187, %v203
        %v220 = vadd.f32 %v188, %v204
        %v221 = vadd.f32 %v189, %v205
        %v222 = vadd.f32 %v190, %v206
        %v223 = vadd.f32 %v191, %v207
        %v224 = vadd.f32 %v192, %v208
        %v225 = vadd.f32 %v193, %v209
        %v226 = vadd.f32 %v194, %v210
        %v227 = vadd.f32 %v195, %v211
        %228 = vst [vmem:[#allocation2] sm:$0xff] %v212
        %229 = vst [vmem:[#allocation2 + $0x8] sm:$0xff] %v213
        %230 = vst [vmem:[#allocation2 + $0x10] sm:$0xff] %v214
        %231 = vst [vmem:[#allocation2 + $0x18] sm:$0xff] %v215
        %232 = vst [vmem:[#allocation2 + $0x20] sm:$0xff] %v216
        %233 = vst [vmem:[#allocation2 + $0x28] sm:$0xff] %v217
        %234 = vst [vmem:[#allocation2 + $0x30] sm:$0xff] %v218
        %235 = vst [vmem:[#allocation2 + $0x38] sm:$0xff] %v219
        %236 = vst [vmem:[#allocation2 + $0x40] sm:$0xff] %v220
        %237 = vst [vmem:[#allocation2 + $0x48] sm:$0xff] %v221
        %238 = vst [vmem:[#allocation2 + $0x50] sm:$0xff] %v222
        %239 = vst [vmem:[#allocation2 + $0x58] sm:$0xff] %v223
        %240 = vst [vmem:[#allocation2 + $0x60] sm:$0xff] %v224
        %241 = vst [vmem:[#allocation2 + $0x68] sm:$0xff] %v225
        %242 = vst [vmem:[#allocation2 + $0x70] sm:$0xff] %v226
        %243 = vst [vmem:[#allocation2 + $0x78] sm:$0xff] %v227
        %p244 = scmp.eq.s32.totalorder %s23, 3
        // Predicated region
        $region33: #{tpu_custom_call.1} parent=23 // pred_check
          %p245 = pneg %p244
        $region34: #{tpu_custom_call.1} parent=23 // pred_check_branch
          %247 = sbr.rel (%p245) target = $region36
        $region35: #{tpu_custom_call.1} parent=23 // pred_region
          %v248 = vld [vmem:[#allocation2] sm:$0xff]
          %v249 = vld [vmem:[#allocation2 + $0x8] sm:$0xff]
          %v250 = vld [vmem:[#allocation2 + $0x10] sm:$0xff]
          %v251 = vld [vmem:[#allocation2 + $0x18] sm:$0xff]
          %v252 = vld [vmem:[#allocation2 + $0x20] sm:$0xff]
          %v253 = vld [vmem:[#allocation2 + $0x28] sm:$0xff]
          %v254 = vld [vmem:[#allocation2 + $0x30] sm:$0xff]
          %v255 = vld [vmem:[#allocation2 + $0x38] sm:$0xff]
          %v256 = vld [vmem:[#allocation2 + $0x40] sm:$0xff]
          %v257 = vld [vmem:[#allocation2 + $0x48] sm:$0xff]
          %v258 = vld [vmem:[#allocation2 + $0x50] sm:$0xff]
          %v259 = vld [vmem:[#allocation2 + $0x58] sm:$0xff]
          %v260 = vld [vmem:[#allocation2 + $0x60] sm:$0xff]
          %v261 = vld [vmem:[#allocation2 + $0x68] sm:$0xff]
          %v262 = vld [vmem:[#allocation2 + $0x70] sm:$0xff]
          %v263 = vld [vmem:[#allocation2 + $0x78] sm:$0xff]
          %v264 = vmul.f32 %v248, 0.25
          %v265 = vmul.f32 %v249, 0.25
          %v266 = vmul.f32 %v250, 0.25
          %v267 = vmul.f32 %v251, 0.25
          %v268 = vmul.f32 %v252, 0.25
          %v269 = vmul.f32 %v253, 0.25
          %v270 = vmul.f32 %v254, 0.25
          %v271 = vmul.f32 %v255, 0.25
          %v272 = vmul.f32 %v256, 0.25
          %v273 = vmul.f32 %v257, 0.25
          %v274 = vmul.f32 %v258, 0.25
          %v275 = vmul.f32 %v259, 0.25
          %v276 = vmul.f32 %v260, 0.25
          %v277 = vmul.f32 %v261, 0.25
          %v278 = vmul.f32 %v262, 0.25
          %v279 = vmul.f32 %v263, 0.25
          %280 = vst [vmem:[#allocation6] sm:$0xff] %v264
          %281 = vst [vmem:[#allocation6 + $0x8] sm:$0xff] %v265
          %282 = vst [vmem:[#allocation6 + $0x10] sm:$0xff] %v266
          %283 = vst [vmem:[#allocation6 + $0x18] sm:$0xff] %v267
          %284 = vst [vmem:[#allocation6 + $0x20] sm:$0xff] %v268
          %285 = vst [vmem:[#allocation6 + $0x28] sm:$0xff] %v269
          %286 = vst [vmem:[#allocation6 + $0x30] sm:$0xff] %v270
          %287 = vst [vmem:[#allocation6 + $0x38] sm:$0xff] %v271
          %288 = vst [vmem:[#allocation6 + $0x40] sm:$0xff] %v272
          %289 = vst [vmem:[#allocation6 + $0x48] sm:$0xff] %v273
          %290 = vst [vmem:[#allocation6 + $0x50] sm:$0xff] %v274
          %291 = vst [vmem:[#allocation6 + $0x58] sm:$0xff] %v275
          %292 = vst [vmem:[#allocation6 + $0x60] sm:$0xff] %v276
          %293 = vst [vmem:[#allocation6 + $0x68] sm:$0xff] %v277
          %294 = vst [vmem:[#allocation6 + $0x70] sm:$0xff] %v278
          %295 = vst [vmem:[#allocation6 + $0x78] sm:$0xff] %v279
        $region36: #{tpu_custom_call.1} parent=23 // pred_fallthru
          _
        // Predicated region
        $region37: #{tpu_custom_call.1} parent=23 // pred_check
          %p296 = pneg %p85
        $region38: #{tpu_custom_call.1} parent=23 // pred_check_branch
          %298 = sbr.rel (%p296) target = $region40
        $region39: #{tpu_custom_call.1} parent=23 // pred_region
          %s299 = smul.u32 16, %s21
          %301 = vsyncadd [#allocation5], 0
          %s302 = sadd.s32 %s22, %s299
          %s303 = smul.addr %s302, 8
          %s304 = scalar_lea.hbm %s1, %s303
          %s305 = sshll.u32 [#allocation6], 4
          %s306 = int_to_ptr.vmem [resolvable:$true] %s305
          %s307 = sshll.u32 %s304, 4
          %s308 = int_to_ptr.hbm [resolvable:$true] %s307
          %313 = dma.vmem_to_hbm [thread:$0]  %s306, 2048, %s308, [#allocation5], 128, 128, 8
        $region40: #{tpu_custom_call.1} parent=23 // pred_fallthru
          _
        // Predicated region
        $region41: #{tpu_custom_call.1} parent=23 // pred_check
          %p314 = pneg %p85
        $region42: #{tpu_custom_call.1} parent=23 // pred_check_branch
          %316 = sbr.rel (%p314) target = $region44
        $region43: #{tpu_custom_call.1} parent=23 // pred_region
          %318 = dma.done [#allocation5], 2048
        $region44: #{tpu_custom_call.1} parent=23 // pred_fallthru
          _
      $region24: #{tpu_custom_call.1} parent=5 // pred_fallthru
        _
      %p319 = scmp.le.s32.totalorder 2, %s11
      // Predicated region
      $region45: #{tpu_custom_call.1} parent=5 // pred_check
        %p320 = pneg %p319
      $region46: #{tpu_custom_call.1} parent=5 // pred_check_branch
        %322 = sbr.rel (%p320) target = $region48
      $region47: #{tpu_custom_call.1} parent=5 // pred_region
        %s323 = ssub.s32 %s11, 2
      $region48: #{tpu_custom_call.1} parent=5 // pred_fallthru
        _
    $region6: #{tpu_custom_call.1} parent=1 // loop_footer
      %s15 = sadd.s32 1, %s11
    $region7: #{tpu_custom_call.1} parent=1 // loop_footer_branch
      %10 = sbr.rel target = $region3
    $region8: #{tpu_custom_call.1} parent=1 // loop_exit
      _
    %324 = vsyncpa [#allocation4], 1
    %s325 = scalar_lea.sflag [#allocation4], 1
    %326 = vsyncpa %s325, 1
    %327 = vsyncpa [#allocation5], 1
    %s328 = scalar_lea.sflag [#allocation5], 1
    %329 = vsyncpa %s328, 1

</llo_original>
